<compile_context>
chip_gen: v6e
topology: v6e:2x2x1
jax: 0.10.0
libtpu: 0.0.40
codegen_flags: <defaults>
</compile_context>

<pallas_src>
import functools

import jax
import jax.numpy as jnp
from jax.experimental import pallas as pl
from jax.experimental.pallas import tpu as pltpu

F_IN = 346    # module's fixed input feature count
F_PAD = 384   # 3 * 128, lane-aligned K
HID = 32      # fc1 output features


def fraud_net_kernel(x_ref, w1_ref, b1_ref, w2_ref, b2_ref, o_ref):
    # fc1 on the MXU: (TB, 384) bf16 @ (384, 32) bf16 -> f32 accumulate.
    h = jnp.dot(x_ref[...], w1_ref[...], preferred_element_type=jnp.float32)
    # bias + ReLU on the VPU.
    h = jnp.maximum(h + b1_ref[...], 0.0)
    # fc2 (N == 1): VPU multiply + XLU lane reduction (keeps the MXU free of a
    # degenerate 1-column matmul).
    y = jnp.sum(h * w2_ref[...], axis=-1) + b2_ref[0, 0]          # (TB,)
    # Lane-dense store: one contiguous (1, TB) row per grid step.
    o_ref[...] = y.reshape(1, -1).astype(o_ref.dtype)


def _round_up(n, m):
    return ((n + m - 1) // m) * m


@functools.partial(jax.jit, static_argnames=("block_b",))
def fraud_network_forward(x, w1, b1, w2, b2, *, block_b=4096):
    """x: (B, 346) f32. w1: (346, 32), b1: (32,), w2: (1, 32) torch layout, b2: (1,).

    Returns (B,) f32, matching `FraudNetwork.forward(x).flatten()`.
    """
    B = x.shape[0]
    # Batch tile: multiple of 16 (bf16 sublane packing); capped at block_b.
    tb = min(block_b, _round_up(B, 16))
    b_pad = _round_up(B, tb)
    num_tiles = b_pad // tb

    # Pad batch to a tile multiple and features 346 -> 384; stream x/w1 as bf16.
    x_p = jnp.zeros((b_pad, F_PAD), jnp.bfloat16).at[:B, :F_IN].set(x.astype(jnp.bfloat16))
    w1_p = jnp.zeros((F_PAD, HID), jnp.bfloat16).at[:F_IN, :].set(w1.astype(jnp.bfloat16))
    b1_r = jnp.asarray(b1, jnp.float32).reshape(1, HID)
    w2_r = jnp.asarray(w2, jnp.float32).reshape(1, HID)
    b2_r = jnp.asarray(b2, jnp.float32).reshape(1, 1)

    out = pl.pallas_call(
        fraud_net_kernel,
        out_shape=jax.ShapeDtypeStruct((1, b_pad), jnp.float32),
        grid_spec=pltpu.PrefetchScalarGridSpec(
            num_scalar_prefetch=0,
            grid=(num_tiles,),
            in_specs=[
                pl.BlockSpec((tb, F_PAD), lambda i: (i, 0)),    # x: tiled over batch
                pl.BlockSpec((F_PAD, HID), lambda i: (0, 0)),   # w1: VMEM-resident
                pl.BlockSpec((1, HID), lambda i: (0, 0)),       # b1: VMEM-resident
                pl.BlockSpec((1, HID), lambda i: (0, 0)),       # w2 row: VMEM-resident
                pl.BlockSpec((1, 1), lambda i: (0, 0)),         # b2: VMEM-resident
            ],
            out_specs=pl.BlockSpec((1, tb), lambda i: (0, i)),  # lane-dense (1, TB) tile
        ),
        compiler_params=pltpu.CompilerParams(
            dimension_semantics=("parallel",),
        ),
    )(x_p, w1_p, b1_r, w2_r, b2_r)

    # (1, b_pad) -> (B,): flatten + drop batch padding (glue, outside the kernel).
    return out.reshape(-1)[:B]


def init_params(key):
    """Deterministic init mimicking nn.Linear defaults: U(-1/sqrt(fan_in), +1/sqrt(fan_in)).

    Layout: w1 is (in, out) = (346, 32) so the kernel computes x @ w1;
            w2 keeps the torch fc2.weight row layout (1, 32); b2 is (1,).
    """
    k1, k2, k3, k4 = jax.random.split(key, 4)
    bound1 = 1.0 / jnp.sqrt(F_IN)
    bound2 = 1.0 / jnp.sqrt(HID)
    w1 = jax.random.uniform(k1, (F_IN, HID), jnp.float32, -bound1, bound1)
    b1 = jax.random.uniform(k2, (HID,), jnp.float32, -bound1, bound1)
    w2 = jax.random.uniform(k3, (1, HID), jnp.float32, -bound2, bound2)
    b2 = jax.random.uniform(k4, (1,), jnp.float32, -bound2, bound2)
    return w1, b1, w2, b2


if __name__ == "__main__":
    key = jax.random.PRNGKey(0)
    kx, kp = jax.random.split(key)

    B = 8  # small demo batch; feature dim fixed at 346 by the module
    x = jax.random.normal(kx, (B, F_IN), jnp.float32)
    w1, b1, w2, b2 = init_params(kp)

    out = jax.block_until_ready(fraud_network_forward(x, w1, b1, w2, b2))
    assert out.shape == (B,)

    # Reference 1: plain-JAX with the same bf16 input casts (tight tolerance).
    h_ref = jnp.maximum(
        jnp.dot(x.astype(jnp.bfloat16), w1.astype(jnp.bfloat16),
                preferred_element_type=jnp.float32) + b1.reshape(1, -1),
        0.0,
    )
    ref_bf16 = (h_ref * w2.reshape(1, -1)).sum(-1) + b2[0]
    assert jnp.allclose(out, ref_bf16, atol=1e-3, rtol=1e-3)

    # Reference 2: full-f32 math (loose tolerance, guards against layout/semantics bugs).
    ref_f32 = (jnp.maximum(x @ w1 + b1.reshape(1, -1), 0.0) @ w2.reshape(-1, 1) + b2).reshape(-1)
    assert jnp.allclose(out, ref_f32, atol=5e-2, rtol=5e-2)

    print("KERNEL_OK")
</pallas_src>

<mosaic_0001>
module attributes {stable_mosaic.version = 11 : i64} {
  func.func @fraud_net_kernel(%arg0: i32, %arg1: memref<16x384xbf16, #tpu.memory_space<vmem>>, %arg2: memref<384x32xbf16, #tpu.memory_space<vmem>>, %arg3: memref<1x32xf32, #tpu.memory_space<vmem>>, %arg4: memref<1x32xf32, #tpu.memory_space<vmem>>, %arg5: memref<1x1xf32, #tpu.memory_space<vmem>>, %arg6: memref<1x16xf32, #tpu.memory_space<vmem>>) attributes {dimension_semantics = [#tpu.dimension_semantics<parallel>], iteration_bounds = array<i64: 1>, scalar_prefetch = 0 : i64, scratch_operands = 0 : i64, tpu.core_type = #tpu.core_type<tc>, window_params = [{transform_indices = @transform_0, window_bounds = array<i64: 16, 384>}, {pipeline_mode = #tpu.pipeline_mode<synchronous>, transform_indices = @transform_1, window_bounds = array<i64: 384, 32>}, {pipeline_mode = #tpu.pipeline_mode<synchronous>, transform_indices = @transform_2, window_bounds = array<i64: 1, 32>}, {pipeline_mode = #tpu.pipeline_mode<synchronous>, transform_indices = @transform_3, window_bounds = array<i64: 1, 32>}, {pipeline_mode = #tpu.pipeline_mode<synchronous>, transform_indices = @transform_4, window_bounds = array<i64: 1, 1>}, {transform_indices = @transform_5, window_bounds = array<i64: 1, 16>}]} {
    %c0 = arith.constant 0 : index
    %c0_0 = arith.constant 0 : index
    %0 = vector.load %arg1[%c0, %c0_0] : memref<16x384xbf16, #tpu.memory_space<vmem>>, vector<16x384xbf16>
    %c0_1 = arith.constant 0 : index
    %c0_2 = arith.constant 0 : index
    %1 = vector.load %arg2[%c0_1, %c0_2] : memref<384x32xbf16, #tpu.memory_space<vmem>>, vector<384x32xbf16>
    %cst = arith.constant dense<0.000000e+00> : vector<16x32xf32>
    %2 = tpu.matmul %0, %1, %cst {dimension_numbers = #tpu.dot_dimension_numbers<[1], [0], [0], [1], [0, 0, 1, 1], [], []>} : vector<16x384xbf16>, vector<384x32xbf16>, vector<16x32xf32> -> vector<16x32xf32>
    %c0_3 = arith.constant 0 : index
    %c0_4 = arith.constant 0 : index
    %3 = vector.load %arg3[%c0_3, %c0_4] : memref<1x32xf32, #tpu.memory_space<vmem>>, vector<1x32xf32>
    %4 = vector.broadcast %3 : vector<1x32xf32> to vector<16x32xf32>
    %5 = arith.addf %2, %4 : vector<16x32xf32>
    %cst_5 = arith.constant 0.000000e+00 : f32
    %6 = vector.broadcast %cst_5 : f32 to vector<16x32xf32>
    %7 = arith.maximumf %5, %6 : vector<16x32xf32>
    %c0_6 = arith.constant 0 : index
    %c0_7 = arith.constant 0 : index
    %8 = vector.load %arg4[%c0_6, %c0_7] : memref<1x32xf32, #tpu.memory_space<vmem>>, vector<1x32xf32>
    %9 = vector.broadcast %8 : vector<1x32xf32> to vector<16x32xf32>
    %10 = arith.mulf %7, %9 : vector<16x32xf32>
    %cst_8 = arith.constant dense<0.000000e+00> : vector<16xf32>
    %11 = vector.multi_reduction <add>, %10, %cst_8 [1] : vector<16x32xf32> to vector<16xf32>
    %c0_9 = arith.constant 0 : index
    %c0_10 = arith.constant 0 : index
    %12 = vector.load %arg5[%c0_9, %c0_10] : memref<1x1xf32, #tpu.memory_space<vmem>>, vector<1x1xf32>
    %13 = vector.extract %12[0, 0] : f32 from vector<1x1xf32>
    %14 = vector.broadcast %13 : f32 to vector<16xf32>
    %15 = arith.addf %11, %14 : vector<16xf32>
    %16 = vector.shape_cast %15 : vector<16xf32> to vector<1x16xf32>
    %c0_11 = arith.constant 0 : index
    %c0_12 = arith.constant 0 : index
    %17 = vector.load %arg6[%c0_11, %c0_12] : memref<1x16xf32, #tpu.memory_space<vmem>>, vector<1x16xf32>
    tpu.vector_store %arg6[%c0_11, %c0_12], %16 {strides = array<i32>} : memref<1x16xf32, #tpu.memory_space<vmem>>, vector<1x16xf32>,
    return
  }
  func.func @transform_0(%arg0: i32) -> (i32, i32) {
    %c0_i32 = arith.constant 0 : i32
    %c0_i32_0 = arith.constant 0 : i32
    return %arg0, %c0_i32 : i32, i32
  }
  func.func @transform_1(%arg0: i32) -> (i32, i32) {
    %c0_i32 = arith.constant 0 : i32
    %c0_i32_0 = arith.constant 0 : i32
    %c0_i32_1 = arith.constant 0 : i32
    return %c0_i32, %c0_i32_0 : i32, i32
  }
  func.func @transform_2(%arg0: i32) -> (i32, i32) {
    %c0_i32 = arith.constant 0 : i32
    %c0_i32_0 = arith.constant 0 : i32
    %c0_i32_1 = arith.constant 0 : i32
    return %c0_i32, %c0_i32_0 : i32, i32
  }
  func.func @transform_3(%arg0: i32) -> (i32, i32) {
    %c0_i32 = arith.constant 0 : i32
    %c0_i32_0 = arith.constant 0 : i32
    %c0_i32_1 = arith.constant 0 : i32
    return %c0_i32, %c0_i32_0 : i32, i32
  }
  func.func @transform_4(%arg0: i32) -> (i32, i32) {
    %c0_i32 = arith.constant 0 : i32
    %c0_i32_0 = arith.constant 0 : i32
    %c0_i32_1 = arith.constant 0 : i32
    return %c0_i32, %c0_i32_0 : i32, i32
  }
  func.func @transform_5(%arg0: i32) -> (i32, i32) {
    %c0_i32 = arith.constant 0 : i32
    %c0_i32_0 = arith.constant 0 : i32
    return %c0_i32, %arg0 : i32, i32
  }
}

</mosaic_0001>

<llo_original>
// kernel: fraud_network_forward.1
$region0: #{fraud_network_forward.1}
  #allocation0 [shape = 'u32[]', space=smem, size = 0x4, offset = 0x4, fixed_abs, tag = 'smem constant byte address 0x4 - core index']
  #allocation1 [shape = 'u32[144,128]{1,0:T(1,128)}', space=vmem, size = 0x12000, scoped, tag = 'internal scratch']
  #allocation2 [shape = 'f32[1,1]{1,0:T(1,128)S(1)}', space=vmem, size = 0x200, scoped, tag = 'scoped memory for fraud_network_forward.1']
  %s0 = inlined_call_operand.vmem [shape: bf16[16,384], index: 0, kind: input, shape index: {}]
  %s1 = inlined_call_operand.vmem [shape: bf16[384,32], index: 1, kind: input, shape index: {}]
  %s2 = inlined_call_operand.vmem [shape: f32[1,32], index: 2, kind: input, shape index: {}]
  %s3 = inlined_call_operand.vmem [shape: f32[1,32], index: 3, kind: input, shape index: {}]
  %s4 = inlined_call_operand.<no memory space> [shape: f32[1,1], index: 4, kind: input, shape index: {}]
  %s5 = inlined_call_operand.vmem [shape: f32[1,16], index: 5, kind: output, shape index: {}]
  %s6 = sld [smem:[#allocation0]]
  $region30: #{fraud_network_forward.1} parent=0
    _
  %s8 = ssub.s32 1, %s6
  %s9 = scalar_select 0, %s8, %s6
  %v10 = vstv %s4
  %11 = vst [vmem:[#allocation2] sm:$0x1] %v10
  // Predicated region
  $region2: #{fraud_network_forward.1} parent=0 // pred_check
    _
  $region3: #{fraud_network_forward.1} parent=0 // pred_check_branch
    %13 = sbr.rel (0) target = $region5
  $region4: #{fraud_network_forward.1} parent=0 // pred_region
    _
  $region5: #{fraud_network_forward.1} parent=0 // pred_fallthru
    _
  // Predicated region
  $region6: #{fraud_network_forward.1} parent=0 // pred_check
    _
  $region7: #{fraud_network_forward.1} parent=0 // pred_check_branch
    %15 = sbr.rel (0) target = $region9
  $region8: #{fraud_network_forward.1} parent=0 // pred_region
    _
  $region9: #{fraud_network_forward.1} parent=0 // pred_fallthru
    _
  // Predicated region
  $region10: #{fraud_network_forward.1} parent=0 // pred_check
    _
  $region11: #{fraud_network_forward.1} parent=0 // pred_check_branch
    %17 = sbr.rel (0) target = $region13
  $region12: #{fraud_network_forward.1} parent=0 // pred_region
    _
  $region13: #{fraud_network_forward.1} parent=0 // pred_fallthru
    _
  // Predicated region
  $region14: #{fraud_network_forward.1} parent=0 // pred_check
    _
  $region15: #{fraud_network_forward.1} parent=0 // pred_check_branch
    %19 = sbr.rel (0) target = $region17
  $region16: #{fraud_network_forward.1} parent=0 // pred_region
    _
  $region17: #{fraud_network_forward.1} parent=0 // pred_fallthru
    _
  // Predicated region
  $region18: #{fraud_network_forward.1} parent=0 // pred_check
    _
  $region19: #{fraud_network_forward.1} parent=0 // pred_check_branch
    %21 = sbr.rel (0) target = $region21
  $region20: #{fraud_network_forward.1} parent=0 // pred_region
    _
  $region21: #{fraud_network_forward.1} parent=0 // pred_fallthru
    _
  %v23 = vld [vmem:[%s0] sm:$0xff]
  %v24 = vld [vmem:[%s0 + $0x8] sm:$0xf]
  %v25 = vld [vmem:[%s0 + $0xc] sm:$0xff]
  %v26 = vld [vmem:[%s0 + $0x14] sm:$0xf]
  %v27 = vld [vmem:[%s1] sm:$0xf]
  %v28 = vld [vmem:[%s1 + $0x4] sm:$0xf]
  %v29 = vld [vmem:[%s1 + $0x8] sm:$0xf]
  %v30 = vld [vmem:[%s1 + $0xc] sm:$0xf]
  %v31 = vld [vmem:[%s1 + $0x10] sm:$0xf]
  %v32 = vld [vmem:[%s1 + $0x14] sm:$0xf]
  %v33 = vld [vmem:[%s1 + $0x18] sm:$0xf]
  %v34 = vld [vmem:[%s1 + $0x1c] sm:$0xf]
  %v35 = vld [vmem:[%s1 + $0x20] sm:$0xf]
  %v36 = vld [vmem:[%s1 + $0x24] sm:$0xf]
  %v37 = vld [vmem:[%s1 + $0x28] sm:$0xf]
  %v38 = vld [vmem:[%s1 + $0x2c] sm:$0xf]
  %v39 = vld [vmem:[%s1 + $0x30] sm:$0xf]
  %v40 = vld [vmem:[%s1 + $0x34] sm:$0xf]
  %v41 = vld [vmem:[%s1 + $0x38] sm:$0xf]
  %v42 = vld [vmem:[%s1 + $0x3c] sm:$0xf]
  %v43 = vld [vmem:[%s1 + $0x40] sm:$0xf]
  %v44 = vld [vmem:[%s1 + $0x44] sm:$0xf]
  %v45 = vld [vmem:[%s1 + $0x48] sm:$0xf]
  %v46 = vld [vmem:[%s1 + $0x4c] sm:$0xf]
  %v47 = vld [vmem:[%s1 + $0x50] sm:$0xf]
  %v48 = vld [vmem:[%s1 + $0x54] sm:$0xf]
  %v49 = vld [vmem:[%s1 + $0x58] sm:$0xf]
  %v50 = vld [vmem:[%s1 + $0x5c] sm:$0xf]
  %v51 = vld [vmem:[%s1 + $0x60] sm:$0xf]
  %v52 = vld [vmem:[%s1 + $0x64] sm:$0xf]
  %v53 = vld [vmem:[%s1 + $0x68] sm:$0xf]
  %v54 = vld [vmem:[%s1 + $0x6c] sm:$0xf]
  %v55 = vld [vmem:[%s1 + $0x70] sm:$0xf]
  %v56 = vld [vmem:[%s1 + $0x74] sm:$0xf]
  %v57 = vld [vmem:[%s1 + $0x78] sm:$0xf]
  %v58 = vld [vmem:[%s1 + $0x7c] sm:$0xf]
  %v59 = vld [vmem:[%s1 + $0x80] sm:$0xf]
  %v60 = vld [vmem:[%s1 + $0x84] sm:$0xf]
  %v61 = vld [vmem:[%s1 + $0x88] sm:$0xf]
  %v62 = vld [vmem:[%s1 + $0x8c] sm:$0xf]
  %v63 = vld [vmem:[%s1 + $0x90] sm:$0xf]
  %v64 = vld [vmem:[%s1 + $0x94] sm:$0xf]
  %v65 = vld [vmem:[%s1 + $0x98] sm:$0xf]
  %v66 = vld [vmem:[%s1 + $0x9c] sm:$0xf]
  %v67 = vld [vmem:[%s1 + $0xa0] sm:$0xf]
  %v68 = vld [vmem:[%s1 + $0xa4] sm:$0xf]
  %v69 = vld [vmem:[%s1 + $0xa8] sm:$0xf]
  %v70 = vld [vmem:[%s1 + $0xac] sm:$0xf]
  %v71 = vld [vmem:[%s1 + $0xb0] sm:$0xf]
  %v72 = vld [vmem:[%s1 + $0xb4] sm:$0xf]
  %v73 = vld [vmem:[%s1 + $0xb8] sm:$0xf]
  %v74 = vld [vmem:[%s1 + $0xbc] sm:$0xf]
  %v75 = vld [vmem:[%s2] sm:$0x1]
  %v77 = vlaneseq
  %v78 = vshrl.u32 %v77, 7
  %v79 = vsub.s32 0, %v78
  %v80 = vrot.slane %v75, %v79
  %v86 = vunpack.c.l.b16 %v23
  %v87 = vunpack.c.h.b16 %v23
  %v88 = vunpack.c.l.b16 %v24
  %v89 = vunpack.c.l.b16 %v25
  %v90 = vunpack.c.h.b16 %v25
  %v91 = vunpack.c.l.b16 %v26
  %v92 = vpack.c.b16 %v89, %v86
  %v93 = vpack.c.b16 %v90, %v87
  %v94 = vpack.c.b16 %v91, %v88
  %v146 = vunpack.c.l.b16 %v27
  %v147 = vunpack.c.l.b16 %v28
  %v148 = vunpack.c.l.b16 %v29
  %v149 = vunpack.c.l.b16 %v30
  %v150 = vunpack.c.l.b16 %v31
  %v151 = vunpack.c.l.b16 %v32
  %v152 = vunpack.c.l.b16 %v33
  %v153 = vunpack.c.l.b16 %v34
  %v154 = vunpack.c.l.b16 %v35
  %v155 = vunpack.c.l.b16 %v36
  %v156 = vunpack.c.l.b16 %v37
  %v157 = vunpack.c.l.b16 %v38
  %v158 = vunpack.c.l.b16 %v39
  %v159 = vunpack.c.l.b16 %v40
  %v160 = vunpack.c.l.b16 %v41
  %v161 = vunpack.c.l.b16 %v42
  %v162 = vunpack.c.l.b16 %v43
  %v163 = vunpack.c.l.b16 %v44
  %v164 = vunpack.c.l.b16 %v45
  %v165 = vunpack.c.l.b16 %v46
  %v166 = vunpack.c.l.b16 %v47
  %v167 = vunpack.c.l.b16 %v48
  %v168 = vunpack.c.l.b16 %v49
  %v169 = vunpack.c.l.b16 %v50
  %v170 = vunpack.c.l.b16 %v51
  %v171 = vunpack.c.l.b16 %v52
  %v172 = vunpack.c.l.b16 %v53
  %v173 = vunpack.c.l.b16 %v54
  %v174 = vunpack.c.l.b16 %v55
  %v175 = vunpack.c.l.b16 %v56
  %v176 = vunpack.c.l.b16 %v57
  %v177 = vunpack.c.l.b16 %v58
  %v178 = vunpack.c.l.b16 %v59
  %v179 = vunpack.c.l.b16 %v60
  %v180 = vunpack.c.l.b16 %v61
  %v181 = vunpack.c.l.b16 %v62
  %v182 = vunpack.c.l.b16 %v63
  %v183 = vunpack.c.l.b16 %v64
  %v184 = vunpack.c.l.b16 %v65
  %v185 = vunpack.c.l.b16 %v66
  %v186 = vunpack.c.l.b16 %v67
  %v187 = vunpack.c.l.b16 %v68
  %v188 = vunpack.c.l.b16 %v69
  %v189 = vunpack.c.l.b16 %v70
  %v190 = vunpack.c.l.b16 %v71
  %v191 = vunpack.c.l.b16 %v72
  %v192 = vunpack.c.l.b16 %v73
  %v193 = vunpack.c.l.b16 %v74
  %v194 = vpack.c.b16 %v147, %v146
  %v195 = vpack.c.b16 %v149, %v148
  %v196 = vpack.c.b16 %v151, %v150
  %v197 = vpack.c.b16 %v153, %v152
  %v198 = vpack.c.b16 %v155, %v154
  %v199 = vpack.c.b16 %v157, %v156
  %v200 = vpack.c.b16 %v159, %v158
  %v201 = vpack.c.b16 %v161, %v160
  %v202 = vpack.c.b16 %v163, %v162
  %v203 = vpack.c.b16 %v165, %v164
  %v204 = vpack.c.b16 %v167, %v166
  %v205 = vpack.c.b16 %v169, %v168
  %v206 = vpack.c.b16 %v171, %v170
  %v207 = vpack.c.b16 %v173, %v172
  %v208 = vpack.c.b16 %v175, %v174
  %v209 = vpack.c.b16 %v177, %v176
  %v210 = vpack.c.b16 %v179, %v178
  %v211 = vpack.c.b16 %v181, %v180
  %v212 = vpack.c.b16 %v183, %v182
  %v213 = vpack.c.b16 %v185, %v184
  %v214 = vpack.c.b16 %v187, %v186
  %v215 = vpack.c.b16 %v189, %v188
  %v216 = vpack.c.b16 %v191, %v190
  %v217 = vpack.c.b16 %v193, %v192
  %242 = vmatprep.subr.bf16.mxu0 0
  %243 = vmatpush1.bf16.msra.mxu0 %v201
  %244 = vmatprep.subr.bf16.mxu0 0
  %245 = vmatpush1.bf16.msra.mxu0 %v200
  %246 = vmatprep.subr.bf16.mxu0 0
  %247 = vmatpush1.bf16.msra.mxu0 %v199
  %248 = vmatprep.subr.bf16.mxu0 0
  %249 = vmatpush1.bf16.msra.mxu0 %v198
  %250 = vmatprep.subr.bf16.mxu0 0
  %251 = vmatpush1.bf16.msra.mxu0 %v197
  %252 = vmatprep.subr.bf16.mxu0 0
  %253 = vmatpush1.bf16.msra.mxu0 %v196
  %254 = vmatprep.subr.bf16.mxu0 0
  %255 = vmatpush1.bf16.msra.mxu0 %v195
  %256 = vmatprep.subr.bf16.mxu0 0
  %257 = vmatpush1.bf16.msra.mxu0 %v194
  %258 = vmatprep.subr.bf16.mxu0 0
  %259 = vmatpush2.bf16.msra.mxu0 %v209
  %260 = vmatprep.subr.bf16.mxu0 0
  %261 = vmatpush2.bf16.msra.mxu0 %v208
  %262 = vmatprep.subr.bf16.mxu0 0
  %263 = vmatpush2.bf16.msra.mxu0 %v207
  %264 = vmatprep.subr.bf16.mxu0 0
  %265 = vmatpush2.bf16.msra.mxu0 %v206
  %266 = vmatprep.subr.bf16.mxu0 0
  %267 = vmatpush2.bf16.msra.mxu0 %v205
  %268 = vmatprep.subr.bf16.mxu0 0
  %269 = vmatpush2.bf16.msra.mxu0 %v204
  %270 = vmatprep.subr.bf16.mxu0 0
  %271 = vmatpush2.bf16.msra.mxu0 %v203
  %272 = vmatprep.subr.bf16.mxu0 0
  %273 = vmatpush2.bf16.msra.mxu0 %v202
  %274 = vmatprep.mubr.bf16.mxu0 %v93
  %275 = vmatmul.mubr.bf16.gmra.mxu0 %v92
  %v276 = vpop.f32.mrf.mxu0
  %v277 = vadd.f32 %v80, %v276
  %v278 = vpop.f32.mrf.mxu0
  %v279 = vpop.f32.mrf.mxu0
  %v280 = vadd.f32 %v80, %v279
  %v281 = vpop.f32.mrf.mxu0
  %282 = vdwg.mxu0
  %283 = vmatprep.subr.bf16.mxu0 0
  %284 = vmatpush1.bf16.msra.mxu0 %v217
  %285 = vmatprep.subr.bf16.mxu0 0
  %286 = vmatpush1.bf16.msra.mxu0 %v216
  %287 = vmatprep.subr.bf16.mxu0 0
  %288 = vmatpush1.bf16.msra.mxu0 %v215
  %289 = vmatprep.subr.bf16.mxu0 0
  %290 = vmatpush1.bf16.msra.mxu0 %v214
  %291 = vmatprep.subr.bf16.mxu0 0
  %292 = vmatpush1.bf16.msra.mxu0 %v213
  %293 = vmatprep.subr.bf16.mxu0 0
  %294 = vmatpush1.bf16.msra.mxu0 %v212
  %295 = vmatprep.subr.bf16.mxu0 0
  %296 = vmatpush1.bf16.msra.mxu0 %v211
  %297 = vmatprep.subr.bf16.mxu0 0
  %298 = vmatpush1.bf16.msra.mxu0 %v210
  %299 = vmatprep.subr.bf16.mxu0 0
  %300 = vmatpush2.bf16.msra.mxu0 0
  %301 = vmatprep.subr.bf16.mxu0 0
  %302 = vmatpush2.bf16.msra.mxu0 0
  %303 = vmatprep.subr.bf16.mxu0 0
  %304 = vmatpush2.bf16.msra.mxu0 0
  %305 = vmatprep.subr.bf16.mxu0 0
  %306 = vmatpush2.bf16.msra.mxu0 0
  %307 = vmatprep.subr.bf16.mxu0 0
  %308 = vmatpush2.bf16.msra.mxu0 0
  %309 = vmatprep.subr.bf16.mxu0 0
  %310 = vmatpush2.bf16.msra.mxu0 0
  %311 = vmatprep.subr.bf16.mxu0 0
  %312 = vmatpush2.bf16.msra.mxu0 0
  %313 = vmatprep.subr.bf16.mxu0 0
  %314 = vmatpush2.bf16.msra.mxu0 0
  %315 = vmatprep.mubr.bf16.mxu0 0
  %316 = vmatmul.mubr.bf16.gmra.mxu0 %v94
  %v317 = vpop.f32.mrf.mxu0
  %v318 = vadd.f32 %v277, %v317
  %v319 = vpop.f32.mrf.mxu0
  %v320 = vpop.f32.mrf.mxu0
  %v321 = vadd.f32 %v280, %v320
  %v322 = vpop.f32.mrf.mxu0
  %323 = vdwg.mxu0
  %v324 = vmax.f32 %v318, 0.0
  %v325 = vmax.f32 %v321, 0.0
  %v326 = vld [vmem:[%s3] sm:$0x1]
  %v328 = vlaneseq
  %v329 = vshrl.u32 %v328, 7
  %v330 = vsub.s32 0, %v329
  %v331 = vrot.slane %v326, %v330
  %v333 = vmul.f32 %v324, %v331
  %v334 = vmul.f32 %v325, %v331
  %vm335 = vcmask 261120
  %v336 = vsel %vm335, %v333, 0.0
  %337 = vadd.xlane.f32.xlu0 %v336
  %v338 = vpop.xlane.xlu0 %337
  %v339 = vsel %vm335, %v334, 0.0
  %340 = vadd.xlane.f32.xlu0 %v339
  %v341 = vpop.xlane.xlu0 %340
  %v342 = vld [vmem:[#allocation2] sm:$0x1]
  %s343 = vtos %v342
  %v344 = vstv %s343
  %v345 = vadd.f32 %v338, %v344
  %v346 = vadd.f32 %v341, %v344
  %v349 = vlaneseq
  %v350 = vand.u32 %v349, 127
  %v351 = vlaneseq
  %v352 = vshrl.u32 %v351, 7
  %v353 = vsub.s32 %v350, %v352
  %v354 = vrot.slane %v345, %v353
  %v355 = vadd.s32 %v350, 4294967288
  %v356 = vlaneseq
  %v357 = vshrl.u32 %v356, 7
  %v358 = vsub.s32 %v355, %v357
  %v359 = vrot.slane %v346, %v358
  %vm360 = vcmask 130112
  %v361 = vsel %vm360, %v359, %v354
  %vm363 = vcmask 122880
  %364 = vst.msk [vmem:[%s5] sm:$0x1] %vm363, %v361
  // Predicated region
  $region22: #{fraud_network_forward.1} parent=0 // pred_check
    _
  $region23: #{fraud_network_forward.1} parent=0 // pred_check_branch
    %366 = sbr.rel (0) target = $region25
  $region24: #{fraud_network_forward.1} parent=0 // pred_region
    _
  $region25: #{fraud_network_forward.1} parent=0 // pred_fallthru
    _
  // Predicated region
  $region26: #{fraud_network_forward.1} parent=0 // pred_check
    _
  $region27: #{fraud_network_forward.1} parent=0 // pred_check_branch
    %368 = sbr.rel (0) target = $region29
  $region28: #{fraud_network_forward.1} parent=0 // pred_region
    _
  $region29: #{fraud_network_forward.1} parent=0 // pred_fallthru
    _

</llo_original>
